<compile_context>
chip_gen: v6e
topology: v6e:2x2x1
jax: 0.10.0
libtpu: 0.0.40
codegen_flags: <defaults>
</compile_context>

<pallas_src>
import math
import functools

import jax
import jax.numpy as jnp
from jax.experimental import pallas as pl
from jax.experimental.pallas import tpu as pltpu


def _round_up(a, b):
    return (a + b - 1) // b * b


def _pick_row_tile(n_base):
    """Row/reduction tile for adj: minimize zero padding, prefer larger tile."""
    if n_base <= 128:
        return n_base                      # block == full array dims (allowed)
    best_tile, best_pad = None, None
    for t in (256, 128):                   # prefer 256 on ties
        pad = _round_up(n_base, t)
        if best_pad is None or pad < best_pad:
            best_tile, best_pad = t, pad
    return best_tile


def _gcn_cached_kernel(adj_ref, x_ref, w_ref, b_ref, out_ref, y_ref, acc_ref):
    """Grid (j, i, k). y_ref caches x @ W[:, j-block] for all k, reused over i."""
    i = pl.program_id(1)
    k = pl.program_id(2)

    @pl.when(k == 0)
    def _init():
        acc_ref[...] = jnp.zeros_like(acc_ref)

    # y[k] = x[k-block] @ W[:, j-block]; computed once per (j, k), reused for all i.
    @pl.when(i == 0)
    def _compute_y():
        y_ref[k] = jnp.dot(
            x_ref[...], w_ref[...], preferred_element_type=jnp.float32
        ).astype(y_ref.dtype)

    # acc += adj[i-block, k-block] @ y[k]
    acc_ref[...] += jnp.dot(adj_ref[...], y_ref[k],
                            preferred_element_type=jnp.float32)

    # Epilogue (bias add + cast) once per output tile.
    @pl.when(k == pl.num_programs(2) - 1)
    def _finalize():
        out_ref[...] = (acc_ref[...] + b_ref[...]).astype(out_ref.dtype)


def _gcn_recompute_kernel(adj_ref, x_ref, w_ref, b_ref, out_ref, acc_ref):
    """Fallback for very large N (y slab would not fit VMEM): recompute x @ W."""
    k = pl.program_id(2)

    @pl.when(k == 0)
    def _init():
        acc_ref[...] = jnp.zeros_like(acc_ref)

    y = jnp.dot(x_ref[...], w_ref[...], preferred_element_type=jnp.float32)
    acc_ref[...] += jnp.dot(adj_ref[...], y.astype(adj_ref.dtype),
                            preferred_element_type=jnp.float32)

    @pl.when(k == pl.num_programs(2) - 1)
    def _finalize():
        out_ref[...] = (acc_ref[...] + b_ref[...]).astype(out_ref.dtype)


_Y_CACHE_BYTES_LIMIT = 8 * 1024 * 1024   # budget for the cached x@W slab in VMEM


@functools.partial(jax.jit, static_argnames=("compute_dtype",))
def graph_convolution(adj, x, weight, bias=None, *, compute_dtype=jnp.bfloat16):
    """output = adj @ (x @ weight) [+ bias]; both matmuls fused in one Pallas kernel."""
    n = adj.shape[0]
    f_in = x.shape[1]
    f_out = weight.shape[1]
    cdt = jnp.dtype(compute_dtype)

    # ---- padding / tile selection (lane-dense last dims) -------------------
    f_out_pad = _round_up(f_out, 128)
    f_in_pad = _round_up(f_in, 128)
    n_base = _round_up(n, 8)
    tile_n = _pick_row_tile(n_base)
    n_pad = _round_up(n_base, tile_n)
    tm = tk = tile_n
    tn = 256 if f_out_pad % 256 == 0 else 128

    adj_p = jnp.zeros((n_pad, n_pad), cdt).at[:n, :n].set(adj.astype(cdt))
    x_p = jnp.zeros((n_pad, f_in_pad), cdt).at[:n, :f_in].set(x.astype(cdt))
    w_p = jnp.zeros((f_in_pad, f_out_pad), cdt).at[:f_in, :f_out].set(
        weight.astype(cdt))
    if bias is None:
        b_p = jnp.zeros((1, f_out_pad), jnp.float32)
    else:
        b_p = jnp.zeros((1, f_out_pad), jnp.float32).at[0, :f_out].set(
            bias.astype(jnp.float32))

    n_i = n_pad // tm
    n_j = f_out_pad // tn
    n_k = n_pad // tk
    grid = (n_j, n_i, n_k)

    y_cache_bytes = n_pad * tn * cdt.itemsize
    use_cache = y_cache_bytes <= _Y_CACHE_BYTES_LIMIT

    adj_spec = pl.BlockSpec((tm, tk), lambda j, i, k: (i, k))
    w_spec = pl.BlockSpec((f_in_pad, tn), lambda j, i, k: (0, j))   # resident per j
    b_spec = pl.BlockSpec((1, tn), lambda j, i, k: (0, j))
    out_spec = pl.BlockSpec((tm, tn), lambda j, i, k: (i, j))

    if use_cache:
        kernel = _gcn_cached_kernel
        # Only fetch the x k-block when it is consumed (i == 0); for i > 0 the
        # block index is frozen so the pipeliner skips the redundant DMA.
        x_spec = pl.BlockSpec((tk, f_in_pad),
                              lambda j, i, k: (jnp.where(i == 0, k, 0), 0))
        scratch = [pltpu.VMEM((n_k, tk, tn), cdt),       # cached y = x @ W[:, j]
                   pltpu.VMEM((tm, tn), jnp.float32)]    # accumulator
        # i must not be split across cores (i == 0 fills the per-core cache).
        dims = ("parallel", "arbitrary", "arbitrary")
    else:
        kernel = _gcn_recompute_kernel
        x_spec = pl.BlockSpec((tk, f_in_pad), lambda j, i, k: (k, 0))
        scratch = [pltpu.VMEM((tm, tn), jnp.float32)]
        dims = ("parallel", "parallel", "arbitrary")

    flops = int(2 * n * f_in * f_out + 2 * n * n * f_out)
    bytes_accessed = int(
        (adj_p.size + x_p.size + w_p.size) * cdt.itemsize
        + b_p.size * 4 + n_pad * f_out_pad * 4)

    out_pad = pl.pallas_call(
        kernel,
        out_shape=jax.ShapeDtypeStruct((n_pad, f_out_pad), jnp.float32),
        grid_spec=pltpu.PrefetchScalarGridSpec(
            num_scalar_prefetch=0,
            grid=grid,
            in_specs=[adj_spec, x_spec, w_spec, b_spec],
            out_specs=out_spec,
            scratch_shapes=scratch,
        ),
        compiler_params=pltpu.CompilerParams(
            dimension_semantics=dims,
            vmem_limit_bytes=32 * 1024 * 1024,
        ),
        cost_estimate=pl.CostEstimate(
            flops=flops, transcendentals=0, bytes_accessed=bytes_accessed),
    )(adj_p, x_p, w_p, b_p)

    return out_pad[:n, :f_out]


def init_graph_convolution_params(key, in_features, out_features, bias=True):
    """Matches PyTorch init: uniform(-1/sqrt(out_features), +1/sqrt(out_features))."""
    std = 1.0 / math.sqrt(out_features)
    kw, kb = jax.random.split(key)
    weight = jax.random.uniform(kw, (in_features, out_features),
                                dtype=jnp.float32, minval=-std, maxval=std)
    b = (jax.random.uniform(kb, (out_features,), dtype=jnp.float32,
                            minval=-std, maxval=std) if bias else None)
    return weight, b


def _make_graph(key, n, f_in):
    k_adj, k_x = jax.random.split(key)
    raw = (jax.random.uniform(k_adj, (n, n)) > 0.6).astype(jnp.float32)
    adj = raw + raw.T + jnp.eye(n, dtype=jnp.float32)
    adj = adj / jnp.sum(adj, axis=1, keepdims=True)   # row-normalized, self-loops
    x = jax.random.normal(k_x, (n, f_in), dtype=jnp.float32)
    return adj, x


if __name__ == "__main__":
    key = jax.random.PRNGKey(0)
    k_g1, k_p1, k_g2, k_p2 = jax.random.split(key, 4)

    # --- Test 1: small module-consistent shapes -----------------------------
    N, F_IN, F_OUT = 8, 32, 16
    adj, x = _make_graph(k_g1, N, F_IN)
    weight, bias = init_graph_convolution_params(k_p1, F_IN, F_OUT, bias=True)
    ref = adj @ (x @ weight) + bias

    # Exact-semantics f32 compute path (matches PyTorch .float() matmuls).
    out_f32 = jax.block_until_ready(
        graph_convolution(adj, x, weight, bias, compute_dtype=jnp.float32))
    assert out_f32.shape == (N, F_OUT)
    assert jnp.allclose(out_f32, ref, atol=1e-5, rtol=1e-5)

    # Default fast path: bf16 inputs, f32 accumulation.
    out_bf16 = jax.block_until_ready(graph_convolution(adj, x, weight, bias))
    assert out_bf16.shape == (N, F_OUT)
    assert jnp.allclose(out_bf16, ref, atol=5e-2, rtol=5e-2)

    # bias=None path.
    out_nb = jax.block_until_ready(
        graph_convolution(adj, x, weight, None, compute_dtype=jnp.float32))
    assert jnp.allclose(out_nb, adj @ (x @ weight), atol=1e-5, rtol=1e-5)

    # --- Test 2: larger shape exercising the tiled grid + K accumulation ----
    N2, F_IN2, F_OUT2 = 300, 64, 40
    adj2, x2 = _make_graph(k_g2, N2, F_IN2)
    w2, b2 = init_graph_convolution_params(k_p2, F_IN2, F_OUT2, bias=True)
    ref2 = adj2 @ (x2 @ w2) + b2
    out2 = jax.block_until_ready(
        graph_convolution(adj2, x2, w2, b2, compute_dtype=jnp.float32))
    assert out2.shape == (N2, F_OUT2)
    assert jnp.allclose(out2, ref2, atol=1e-4, rtol=1e-4)

    # bf16 fast path on the larger shape as well.
    out2_bf16 = jax.block_until_ready(graph_convolution(adj2, x2, w2, b2))
    assert jnp.allclose(out2_bf16, ref2, atol=5e-2, rtol=5e-2)

    print("KERNEL_OK")
</pallas_src>

<mosaic_0001>
module attributes {stable_mosaic.version = 11 : i64} {
  func.func @_gcn_cached_kernel(%arg0: i32, %arg1: i32, %arg2: i32, %arg3: memref<8x8xf32, #tpu.memory_space<vmem>>, %arg4: memref<8x128xf32, #tpu.memory_space<vmem>>, %arg5: memref<128x128xf32, #tpu.memory_space<vmem>>, %arg6: memref<1x128xf32, #tpu.memory_space<vmem>>, %arg7: memref<8x128xf32, #tpu.memory_space<vmem>>, %arg8: memref<1x8x128xf32, #tpu.memory_space<vmem>>, %arg9: memref<8x128xf32, #tpu.memory_space<vmem>>) attributes {dimension_semantics = [#tpu.dimension_semantics<parallel>, #tpu.dimension_semantics<arbitrary>, #tpu.dimension_semantics<arbitrary>], iteration_bounds = array<i64: 1, 1, 1>, scalar_prefetch = 0 : i64, scratch_operands = 2 : i64, tpu.core_type = #tpu.core_type<tc>, window_params = [{transform_indices = @transform_0, window_bounds = array<i64: 8, 8>}, {transform_indices = @transform_1, window_bounds = array<i64: 8, 128>}, {transform_indices = @transform_2, window_bounds = array<i64: 128, 128>}, {transform_indices = @transform_3, window_bounds = array<i64: 1, 128>}, {transform_indices = @transform_4, window_bounds = array<i64: 8, 128>}]} {
    %c0_i32 = arith.constant 0 : i32
    %0 = arith.cmpi eq, %arg2, %c0_i32 : i32
    %1 = arith.extui %0 : i1 to i32
    %c0_i32_0 = arith.constant 0 : i32
    %2 = arith.cmpi ne, %1, %c0_i32_0 : i32
    scf.if %2 {
      %cst_12 = arith.constant 0.000000e+00 : f32
      %17 = vector.broadcast %cst_12 : f32 to vector<8x128xf32>
      %c0_13 = arith.constant 0 : index
      %c0_14 = arith.constant 0 : index
      %18 = vector.load %arg9[%c0_13, %c0_14] : memref<8x128xf32, #tpu.memory_space<vmem>>, vector<8x128xf32>
      tpu.vector_store %arg9[%c0_13, %c0_14], %17 {strides = array<i32>} : memref<8x128xf32, #tpu.memory_space<vmem>>, vector<8x128xf32>,
    } else {
    }
    %c0_i32_1 = arith.constant 0 : i32
    %3 = arith.cmpi eq, %arg1, %c0_i32_1 : i32
    %4 = arith.extui %3 : i1 to i32
    %c0_i32_2 = arith.constant 0 : i32
    %5 = arith.cmpi ne, %4, %c0_i32_2 : i32
    scf.if %5 {
      %c0_12 = arith.constant 0 : index
      %c0_13 = arith.constant 0 : index
      %17 = vector.load %arg4[%c0_12, %c0_13] : memref<8x128xf32, #tpu.memory_space<vmem>>, vector<8x128xf32>
      %c0_14 = arith.constant 0 : index
      %c0_15 = arith.constant 0 : index
      %18 = vector.load %arg5[%c0_14, %c0_15] : memref<128x128xf32, #tpu.memory_space<vmem>>, vector<128x128xf32>
      %cst_16 = arith.constant dense<0.000000e+00> : vector<8x128xf32>
      %19 = tpu.matmul %17, %18, %cst_16 {dimension_numbers = #tpu.dot_dimension_numbers<[1], [0], [0], [1], [0, 0, 1, 1], [], []>} : vector<8x128xf32>, vector<128x128xf32>, vector<8x128xf32> -> vector<8x128xf32>
      %20 = arith.index_cast %arg2 : i32 to index
      %c0_17 = arith.constant 0 : index
      %c0_18 = arith.constant 0 : index
      %21 = vector.load %arg8[%20, %c0_17, %c0_18] : memref<1x8x128xf32, #tpu.memory_space<vmem>>, vector<1x8x128xf32>
      %22 = vector.shape_cast %21 : vector<1x8x128xf32> to vector<8x128xf32>
      %23 = vector.shape_cast %19 : vector<8x128xf32> to vector<1x8x128xf32>
      tpu.vector_store %arg8[%20, %c0_17, %c0_18], %23 {strides = array<i32>} : memref<1x8x128xf32, #tpu.memory_space<vmem>>, vector<1x8x128xf32>,
    } else {
    }
    %c0 = arith.constant 0 : index
    %c0_3 = arith.constant 0 : index
    %6 = vector.load %arg9[%c0, %c0_3] : memref<8x128xf32, #tpu.memory_space<vmem>>, vector<8x128xf32>
    %c0_4 = arith.constant 0 : index
    %c0_5 = arith.constant 0 : index
    %7 = vector.load %arg3[%c0_4, %c0_5] : memref<8x8xf32, #tpu.memory_space<vmem>>, vector<8x8xf32>
    %8 = arith.index_cast %arg2 : i32 to index
    %c0_6 = arith.constant 0 : index
    %c0_7 = arith.constant 0 : index
    %9 = vector.load %arg8[%8, %c0_6, %c0_7] : memref<1x8x128xf32, #tpu.memory_space<vmem>>, vector<1x8x128xf32>
    %10 = vector.shape_cast %9 : vector<1x8x128xf32> to vector<8x128xf32>
    %cst = arith.constant dense<0.000000e+00> : vector<8x128xf32>
    %11 = tpu.matmul %7, %10, %cst {dimension_numbers = #tpu.dot_dimension_numbers<[1], [0], [0], [1], [0, 0, 1, 1], [], []>} : vector<8x8xf32>, vector<8x128xf32>, vector<8x128xf32> -> vector<8x128xf32>
    %12 = arith.addf %6, %11 : vector<8x128xf32>
    %c0_8 = arith.constant 0 : index
    %c0_9 = arith.constant 0 : index
    %13 = vector.load %arg9[%c0_8, %c0_9] : memref<8x128xf32, #tpu.memory_space<vmem>>, vector<8x128xf32>
    tpu.vector_store %arg9[%c0_8, %c0_9], %12 {strides = array<i32>} : memref<8x128xf32, #tpu.memory_space<vmem>>, vector<8x128xf32>,
    %c0_i32_10 = arith.constant 0 : i32
    %14 = arith.cmpi eq, %arg2, %c0_i32_10 : i32
    %15 = arith.extui %14 : i1 to i32
    %c0_i32_11 = arith.constant 0 : i32
    %16 = arith.cmpi ne, %15, %c0_i32_11 : i32
    scf.if %16 {
      %c0_12 = arith.constant 0 : index
      %c0_13 = arith.constant 0 : index
      %17 = vector.load %arg9[%c0_12, %c0_13] : memref<8x128xf32, #tpu.memory_space<vmem>>, vector<8x128xf32>
      %c0_14 = arith.constant 0 : index
      %c0_15 = arith.constant 0 : index
      %18 = vector.load %arg6[%c0_14, %c0_15] : memref<1x128xf32, #tpu.memory_space<vmem>>, vector<1x128xf32>
      %19 = vector.broadcast %18 : vector<1x128xf32> to vector<8x128xf32>
      %20 = arith.addf %17, %19 : vector<8x128xf32>
      %c0_16 = arith.constant 0 : index
      %c0_17 = arith.constant 0 : index
      %21 = vector.load %arg7[%c0_16, %c0_17] : memref<8x128xf32, #tpu.memory_space<vmem>>, vector<8x128xf32>
      tpu.vector_store %arg7[%c0_16, %c0_17], %20 {strides = array<i32>} : memref<8x128xf32, #tpu.memory_space<vmem>>, vector<8x128xf32>,
    } else {
    }
    return
  }
  func.func @transform_0(%arg0: i32, %arg1: i32, %arg2: i32) -> (i32, i32) {
    %c0_i32 = arith.constant 0 : i32
    return %arg1, %arg2 : i32, i32
  }
  func.func @transform_1(%arg0: i32, %arg1: i32, %arg2: i32) -> (i32, i32) {
    %c0_i32 = arith.constant 0 : i32
    %0 = arith.cmpi eq, %arg1, %c0_i32 : i32
    %c0_i32_0 = arith.constant 0 : i32
    %1 = arith.select %0, %arg2, %c0_i32_0 : i32
    %c0_i32_1 = arith.constant 0 : i32
    %c0_i32_2 = arith.constant 0 : i32
    return %1, %c0_i32_1 : i32, i32
  }
  func.func @transform_2(%arg0: i32, %arg1: i32, %arg2: i32) -> (i32, i32) {
    %c0_i32 = arith.constant 0 : i32
    %c0_i32_0 = arith.constant 0 : i32
    return %c0_i32, %arg0 : i32, i32
  }
  func.func @transform_3(%arg0: i32, %arg1: i32, %arg2: i32) -> (i32, i32) {
    %c0_i32 = arith.constant 0 : i32
    %c0_i32_0 = arith.constant 0 : i32
    return %c0_i32, %arg0 : i32, i32
  }
  func.func @transform_4(%arg0: i32, %arg1: i32, %arg2: i32) -> (i32, i32) {
    %c0_i32 = arith.constant 0 : i32
    return %arg1, %arg0 : i32, i32
  }
}

</mosaic_0001>

<llo_original>
// kernel: graph_convolution.1
$region0: #{graph_convolution.1}
  #allocation0 [shape = 'u32[]', space=smem, size = 0x4, offset = 0x4, fixed_abs, tag = 'smem constant byte address 0x4 - core index']
  #allocation1 [shape = 'u32[144,128]{1,0:T(1,128)}', space=vmem, size = 0x12000, scoped, tag = 'internal scratch']
  #allocation2 [shape = 'f32[1,8,128]{2,1,0:T(8,128)}', space=vmem, size = 0x1000, scoped, tag = 'scratch operand']
  #allocation3 [shape = 'f32[8,128]{1,0:T(8,128)}', space=vmem, size = 0x1000, scoped, tag = 'scratch operand']
  %s0 = inlined_call_operand.vmem [shape: f32[8,8], index: 0, kind: input, shape index: {}]
  %s1 = inlined_call_operand.vmem [shape: f32[8,128], index: 1, kind: input, shape index: {}]
  %s2 = inlined_call_operand.vmem [shape: f32[128,128], index: 2, kind: input, shape index: {}]
  %s3 = inlined_call_operand.vmem [shape: f32[1,128], index: 3, kind: input, shape index: {}]
  %s4 = inlined_call_operand.hbm [shape: f32[8,128], index: 4, kind: output, shape index: {}]
  %s5 = sld [smem:[#allocation0]]
  $region38: #{graph_convolution.1} parent=0
    _
  %s7 = ssub.s32 1, %s5
  %s8 = scalar_select 0, %s7, %s5
  $region1: #{graph_convolution.1} parent=0
    #allocation4 [shape = 'u8[4096]{0}', space=vmem, size = 0x1000, scoped, tag = 'output window, operand 0, single buffered']
    #allocation5 [shape = 's32[1]{0}', space=sflag, size = 0x4, scoped, tag = 'scoped memory for graph_convolution.1']
    %9 = vsyncpa [#allocation5], 0
    // Predicated region
    $region2: #{graph_convolution.1} parent=1 // pred_check
      _
    $region3: #{graph_convolution.1} parent=1 // pred_check_branch
      %11 = sbr.rel (0) target = $region5
    $region4: #{graph_convolution.1} parent=1 // pred_region
      _
    $region5: #{graph_convolution.1} parent=1 // pred_fallthru
      _
    // Predicated region
    $region6: #{graph_convolution.1} parent=1 // pred_check
      _
    $region7: #{graph_convolution.1} parent=1 // pred_check_branch
      %13 = sbr.rel (0) target = $region9
    $region8: #{graph_convolution.1} parent=1 // pred_region
      %p14 = scmp.eq.s32.totalorder 0, 0
      %s15 = scalar_select %p14, 0, 0
      %p16 = scmp.lt.s32.totalorder %s15, 0
      %s17 = scalar_select %p16, %s15, 0
      %s18 = smul.addr %s17, 8
      %s19 = scalar_lea.vmem %s1, %s18
      %p20 = scmp.eq.s32.totalorder 0, 0
      %s21 = scalar_select %p20, 0, 0
    $region9: #{graph_convolution.1} parent=1 // pred_fallthru
      _
    // Predicated region
    $region10: #{graph_convolution.1} parent=1 // pred_check
      _
    $region11: #{graph_convolution.1} parent=1 // pred_check_branch
      %23 = sbr.rel (0) target = $region13
    $region12: #{graph_convolution.1} parent=1 // pred_region
      _
    $region13: #{graph_convolution.1} parent=1 // pred_fallthru
      _
    // Predicated region
    $region14: #{graph_convolution.1} parent=1 // pred_check
      _
    $region15: #{graph_convolution.1} parent=1 // pred_check_branch
      %25 = sbr.rel (0) target = $region17
    $region16: #{graph_convolution.1} parent=1 // pred_region
      _
    $region17: #{graph_convolution.1} parent=1 // pred_fallthru
      _
    %p26 = scmp.eq.s32.totalorder 0, 0
    %s27 = scalar_select %p26, 0, 0
    %p28 = scmp.lt.s32.totalorder %s27, 0
    %s29 = scalar_select %p28, %s27, 0
    %s30 = smul.addr %s29, 8
    %s31 = scalar_lea.vmem %s1, %s30
    %p32 = scmp.eq.s32.totalorder 0, 0
    %s33 = scalar_select %p32, 0, 0
    %p34 = scmp.lt.s32.totalorder %s33, 0
    %s35 = scalar_select %p34, %s33, 0
    %s36 = smul.addr %s35, 8
    %s37 = scalar_lea.vmem %s1, %s36
    %p38 = scmp.eq.s32.totalorder 0, 0
    %s39 = scalar_select %p38, 0, 0
    %p40 = scmp.eq.s32.totalorder 0, 0
    // Predicated region
    $region18: #{graph_convolution.1} parent=1 // pred_check
      %p41 = pneg %p40
    $region19: #{graph_convolution.1} parent=1 // pred_check_branch
      %43 = sbr.rel (%p41) target = $region21
    $region20: #{graph_convolution.1} parent=1 // pred_region
      %44 = vst [vmem:[#allocation3] sm:$0xff] 0.0
    $region21: #{graph_convolution.1} parent=1 // pred_fallthru
      _
    %p45 = scmp.eq.s32.totalorder 0, 0
    // Predicated region
    $region22: #{graph_convolution.1} parent=1 // pred_check
      %p46 = pneg %p45
    $region23: #{graph_convolution.1} parent=1 // pred_check_branch
      %48 = sbr.rel (%p46) target = $region25
    $region24: #{graph_convolution.1} parent=1 // pred_region
      %v49 = vld [vmem:[%s37] sm:$0xff]
      %v50 = vld [vmem:[%s2] sm:$0xff]
      %v51 = vld [vmem:[%s2 + $0x8] sm:$0xff]
      %v52 = vld [vmem:[%s2 + $0x10] sm:$0xff]
      %v53 = vld [vmem:[%s2 + $0x18] sm:$0xff]
      %v54 = vld [vmem:[%s2 + $0x20] sm:$0xff]
      %v55 = vld [vmem:[%s2 + $0x28] sm:$0xff]
      %v56 = vld [vmem:[%s2 + $0x30] sm:$0xff]
      %v57 = vld [vmem:[%s2 + $0x38] sm:$0xff]
      %v58 = vld [vmem:[%s2 + $0x40] sm:$0xff]
      %v59 = vld [vmem:[%s2 + $0x48] sm:$0xff]
      %v60 = vld [vmem:[%s2 + $0x50] sm:$0xff]
      %v61 = vld [vmem:[%s2 + $0x58] sm:$0xff]
      %v62 = vld [vmem:[%s2 + $0x60] sm:$0xff]
      %v63 = vld [vmem:[%s2 + $0x68] sm:$0xff]
      %v64 = vld [vmem:[%s2 + $0x70] sm:$0xff]
      %v65 = vld [vmem:[%s2 + $0x78] sm:$0xff]
      %66 = vmatprep.subr.mxu0 0.0
      %67 = vmatpush1.msra.mxu0 %v65
      %68 = vmatprep.subr.mxu0 0.0
      %69 = vmatpush1.msra.mxu0 %v64
      %70 = vmatprep.subr.mxu0 0.0
      %71 = vmatpush1.msra.mxu0 %v63
      %72 = vmatprep.subr.mxu0 0.0
      %73 = vmatpush1.msra.mxu0 %v62
      %74 = vmatprep.subr.mxu0 0.0
      %75 = vmatpush1.msra.mxu0 %v61
      %76 = vmatprep.subr.mxu0 0.0
      %77 = vmatpush1.msra.mxu0 %v60
      %78 = vmatprep.subr.mxu0 0.0
      %79 = vmatpush1.msra.mxu0 %v59
      %80 = vmatprep.subr.mxu0 0.0
      %81 = vmatpush1.msra.mxu0 %v58
      %82 = vmatprep.subr.mxu0 0.0
      %83 = vmatpush1.msra.mxu0 %v57
      %84 = vmatprep.subr.mxu0 0.0
      %85 = vmatpush1.msra.mxu0 %v56
      %86 = vmatprep.subr.mxu0 0.0
      %87 = vmatpush1.msra.mxu0 %v55
      %88 = vmatprep.subr.mxu0 0.0
      %89 = vmatpush1.msra.mxu0 %v54
      %90 = vmatprep.subr.mxu0 0.0
      %91 = vmatpush1.msra.mxu0 %v53
      %92 = vmatprep.subr.mxu0 0.0
      %93 = vmatpush1.msra.mxu0 %v52
      %94 = vmatprep.subr.mxu0 0.0
      %95 = vmatpush1.msra.mxu0 %v51
      %96 = vmatprep.subr.mxu0 0.0
      %97 = vmatpush1.msra.mxu0 %v50
      %98 = vmatprep.subr.mxu0 0.0
      %99 = vmatpush2.msra.mxu0 0.0
      %100 = vmatprep.subr.mxu0 0.0
      %101 = vmatpush2.msra.mxu0 0.0
      %102 = vmatprep.subr.mxu0 0.0
      %103 = vmatpush2.msra.mxu0 0.0
      %104 = vmatprep.subr.mxu0 0.0
      %105 = vmatpush2.msra.mxu0 0.0
      %106 = vmatprep.subr.mxu0 0.0
      %107 = vmatpush2.msra.mxu0 0.0
      %108 = vmatprep.subr.mxu0 0.0
      %109 = vmatpush2.msra.mxu0 0.0
      %110 = vmatprep.subr.mxu0 0.0
      %111 = vmatpush2.msra.mxu0 0.0
      %112 = vmatprep.subr.mxu0 0.0
      %113 = vmatpush2.msra.mxu0 0.0
      %114 = vmatprep.subr.mxu0 0.0
      %115 = vmatpush2.msra.mxu0 0.0
      %116 = vmatprep.subr.mxu0 0.0
      %117 = vmatpush2.msra.mxu0 0.0
      %118 = vmatprep.subr.mxu0 0.0
      %119 = vmatpush2.msra.mxu0 0.0
      %120 = vmatprep.subr.mxu0 0.0
      %121 = vmatpush2.msra.mxu0 0.0
      %122 = vmatprep.subr.mxu0 0.0
      %123 = vmatpush2.msra.mxu0 0.0
      %124 = vmatprep.subr.mxu0 0.0
      %125 = vmatpush2.msra.mxu0 0.0
      %126 = vmatprep.subr.mxu0 0.0
      %127 = vmatpush2.msra.mxu0 0.0
      %128 = vmatprep.subr.mxu0 0.0
      %129 = vmatpush2.msra.mxu0 0.0
      %130 = vmatprep.mubr.f32.mxu0 0.0
      %131 = vmatmul.mubr.f32.gmra.mxu0 %v49
      %v132 = vpop.f32.mrf.mxu0
      %v133 = vadd.f32 0.0, %v132
      %v134 = vpop.f32.mrf.mxu0
      %135 = vdwg.mxu0
      %s136 = smul.u32 0, 8
      %s137 = scalar_lea.vmem [#allocation2], %s136
      %138 = vst [vmem:[%s137] sm:$0xff] %v133
    $region25: #{graph_convolution.1} parent=1 // pred_fallthru
      _
    %v139 = vld [vmem:[#allocation3] sm:$0xff]
    %v140 = vld [vmem:[%s0] sm:$0xff]
    %s141 = smul.u32 0, 8
    %s142 = scalar_lea.vmem [#allocation2], %s141
    %v143 = vld [vmem:[%s142] sm:$0xff]
    %vm144 = vcmask 64512
    %v146 = vsel %vm144, %v140, 0
    %148 = vmatprep.subr.mxu0 0.0
    %149 = vmatpush1.msra.mxu0 0.0
    %150 = vmatprep.subr.mxu0 0.0
    %151 = vmatpush1.msra.mxu0 0.0
    %152 = vmatprep.subr.mxu0 0.0
    %153 = vmatpush1.msra.mxu0 0.0
    %154 = vmatprep.subr.mxu0 0.0
    %155 = vmatpush1.msra.mxu0 0.0
    %156 = vmatprep.subr.mxu0 0.0
    %157 = vmatpush1.msra.mxu0 0.0
    %158 = vmatprep.subr.mxu0 0.0
    %159 = vmatpush1.msra.mxu0 0.0
    %160 = vmatprep.subr.mxu0 0.0
    %161 = vmatpush1.msra.mxu0 0.0
    %162 = vmatprep.subr.mxu0 0.0
    %163 = vmatpush1.msra.mxu0 0.0
    %164 = vmatprep.subr.mxu0 0.0
    %165 = vmatpush1.msra.mxu0 0.0
    %166 = vmatprep.subr.mxu0 0.0
    %167 = vmatpush1.msra.mxu0 0.0
    %168 = vmatprep.subr.mxu0 0.0
    %169 = vmatpush1.msra.mxu0 0.0
    %170 = vmatprep.subr.mxu0 0.0
    %171 = vmatpush1.msra.mxu0 0.0
    %172 = vmatprep.subr.mxu0 0.0
    %173 = vmatpush1.msra.mxu0 0.0
    %174 = vmatprep.subr.mxu0 0.0
    %175 = vmatpush1.msra.mxu0 0.0
    %176 = vmatprep.subr.mxu0 0.0
    %177 = vmatpush1.msra.mxu0 0.0
    %178 = vmatprep.subr.mxu0 0.0
    %179 = vmatpush1.msra.mxu0 %v143
    %180 = vmatprep.subr.mxu0 0.0
    %181 = vmatpush2.msra.mxu0 0.0
    %182 = vmatprep.subr.mxu0 0.0
    %183 = vmatpush2.msra.mxu0 0.0
    %184 = vmatprep.subr.mxu0 0.0
    %185 = vmatpush2.msra.mxu0 0.0
    %186 = vmatprep.subr.mxu0 0.0
    %187 = vmatpush2.msra.mxu0 0.0
    %188 = vmatprep.subr.mxu0 0.0
    %189 = vmatpush2.msra.mxu0 0.0
    %190 = vmatprep.subr.mxu0 0.0
    %191 = vmatpush2.msra.mxu0 0.0
    %192 = vmatprep.subr.mxu0 0.0
    %193 = vmatpush2.msra.mxu0 0.0
    %194 = vmatprep.subr.mxu0 0.0
    %195 = vmatpush2.msra.mxu0 0.0
    %196 = vmatprep.subr.mxu0 0.0
    %197 = vmatpush2.msra.mxu0 0.0
    %198 = vmatprep.subr.mxu0 0.0
    %199 = vmatpush2.msra.mxu0 0.0
    %200 = vmatprep.subr.mxu0 0.0
    %201 = vmatpush2.msra.mxu0 0.0
    %202 = vmatprep.subr.mxu0 0.0
    %203 = vmatpush2.msra.mxu0 0.0
    %204 = vmatprep.subr.mxu0 0.0
    %205 = vmatpush2.msra.mxu0 0.0
    %206 = vmatprep.subr.mxu0 0.0
    %207 = vmatpush2.msra.mxu0 0.0
    %208 = vmatprep.subr.mxu0 0.0
    %209 = vmatpush2.msra.mxu0 0.0
    %210 = vmatprep.subr.mxu0 0.0
    %211 = vmatpush2.msra.mxu0 0.0
    %212 = vmatprep.mubr.f32.mxu0 0.0
    %213 = vmatmul.mubr.f32.gmra.mxu0 %v146
    %v214 = vpop.f32.mrf.mxu0
    %v215 = vadd.f32 0.0, %v214
    %v216 = vpop.f32.mrf.mxu0
    %217 = vdwg.mxu0
    %v218 = vadd.f32 %v139, %v215
    %219 = vst [vmem:[#allocation3] sm:$0xff] %v218
    // Predicated region
    $region26: #{graph_convolution.1} parent=1 // pred_check
      %p220 = pneg %p40
    $region27: #{graph_convolution.1} parent=1 // pred_check_branch
      %222 = sbr.rel (%p220) target = $region29
    $region28: #{graph_convolution.1} parent=1 // pred_region
      %v223 = vld [vmem:[#allocation3] sm:$0xff]
      %v224 = vld [vmem:[%s3] sm:$0x1]
      %v226 = vlaneseq
      %v227 = vshrl.u32 %v226, 7
      %v228 = vsub.s32 0, %v227
      %v229 = vrot.slane %v224, %v228
      %v231 = vadd.f32 %v223, %v229
      %232 = vst [vmem:[#allocation4] sm:$0xff] %v231
    $region29: #{graph_convolution.1} parent=1 // pred_fallthru
      _
    // Predicated region
    $region30: #{graph_convolution.1} parent=1 // pred_check
      _
    $region31: #{graph_convolution.1} parent=1 // pred_check_branch
      %234 = sbr.rel (0) target = $region33
    $region32: #{graph_convolution.1} parent=1 // pred_region
      %s236 = ssub.s32 128, 128
      %237 = vsyncadd [#allocation5], %s236
      %s239 = sshll.u32 [#allocation4], 4
      %s240 = int_to_ptr.vmem [resolvable:$true] %s239
      %242 = dma.vmem_to_hbm [thread:$0]  %s240, 128, %s4, [#allocation5]
    $region33: #{graph_convolution.1} parent=1 // pred_fallthru
      _
    // Predicated region
    $region34: #{graph_convolution.1} parent=1 // pred_check
      _
    $region35: #{graph_convolution.1} parent=1 // pred_check_branch
      %244 = sbr.rel (0) target = $region37
    $region36: #{graph_convolution.1} parent=1 // pred_region
      %245 = dma.done [#allocation5], 128
    $region37: #{graph_convolution.1} parent=1 // pred_fallthru
      _
    %246 = vsyncpa [#allocation5], 1

</llo_original>
